<compile_context>
chip_gen: v7x
topology: tpu7x:2x2x1
jax: 0.10.0
libtpu: 0.0.40
codegen_flags: <defaults>
</compile_context>

<pallas_src>
import functools

import jax
import jax.numpy as jnp
from jax.experimental import pallas as pl
from jax.experimental.pallas import tpu as pltpu


def _round_up(x, m):
    return (x + m - 1) // m * m


# ---------------------------------------------------------------------------
# Fused FlattenHead kernel (single full-K dot per output tile):
#   o[m, n] = (sum_k x[m, k] * w[k, n] + bias[n]) * scale[m] + shift[m]
# ---------------------------------------------------------------------------
def _head_kernel(x_ref, w_ref, b_ref, sc_ref, sh_ref, o_ref):
    x = x_ref[...].astype(jnp.bfloat16)          # cast in-register, not in XLA
    y = jnp.dot(x, w_ref[...], preferred_element_type=jnp.float32)
    y = y + b_ref[...]                           # (tm, tn) + (1, tn)
    y = y * sc_ref[...] + sh_ref[...]            # de-norm, (tm, 1) row broadcast
    o_ref[...] = y.astype(o_ref.dtype)


def fused_flatten_head(x, w_t, bias, scale, shift, *, tm, tn):
    """x: (M, K) f32; w_t: (K, N) bf16; bias: (1, N) f32; scale/shift: (M, 1) f32
    -> (M, N) f32.  M may be ragged (partial last tile is masked); K and N are
    taken as full-extent block dims."""
    M, K = x.shape
    N = w_t.shape[1]
    grid = (pl.cdiv(M, tm), pl.cdiv(N, tn))
    return pl.pallas_call(
        _head_kernel,
        grid_spec=pltpu.PrefetchScalarGridSpec(
            num_scalar_prefetch=0,
            grid=grid,
            in_specs=[
                pl.BlockSpec((tm, K), lambda i, j: (i, 0)),   # activations (f32)
                pl.BlockSpec((K, tn), lambda i, j: (0, j)),   # weight (bf16)
                pl.BlockSpec((1, tn), lambda i, j: (0, j)),   # bias
                pl.BlockSpec((tm, 1), lambda i, j: (i, 0)),   # stdev per row
                pl.BlockSpec((tm, 1), lambda i, j: (i, 0)),   # mean per row
            ],
            out_specs=pl.BlockSpec((tm, tn), lambda i, j: (i, j)),
        ),
        out_shape=jax.ShapeDtypeStruct((M, N), jnp.float32),
        compiler_params=pltpu.CompilerParams(
            dimension_semantics=("parallel", "parallel"),
            vmem_limit_bytes=48 * 1024 * 1024),   # safe on v7x's 64 MiB VMEM
    )(x, w_t, bias, scale, shift)


# ---------------------------------------------------------------------------
# Tile selection
# ---------------------------------------------------------------------------
def _choose_tm(M):
    """Multiple of 8; once M is big enough, aim for >=2 row tiles so a
    'parallel' grid axis can shard across both v7x TensorCores, while never
    padding M by more than a few rows."""
    if M >= 512:
        return 256
    if M >= 16:
        return min(256, _round_up((M + 1) // 2, 8))
    return _round_up(M, 8)


def _choose_tn(N):
    if N % 128 == 0:
        return min(256, N)
    return N  # full-extent block is always a legal block dim


# ---------------------------------------------------------------------------
# Parameters (torch nn.Linear layout) + one-time layout preparation
# ---------------------------------------------------------------------------
def init_client_head_params(key, d_model, token_num, pred_len):
    fea = d_model * token_num
    kw, kb = jax.random.split(key)
    w = jax.random.normal(kw, (pred_len, fea), jnp.float32) * 0.05  # (out, in)
    b = jax.random.normal(kb, (pred_len,), jnp.float32) * 0.05
    return {"weight": w, "bias": b}


def _prepare_head_weights(params, d_model, token_num):
    """One-time work hoisted out of the forward: torch flattens (d_model,
    token_num) with feature index d*T + t; the kernel consumes x_enc reshaped
    as (BS, T*D) with feature index t*D + d, so permute the weight to match,
    transpose to (K, N) and cast to bf16 for the MXU."""
    w, b = params["weight"], params["bias"]
    pred_len = w.shape[0]
    K = token_num * d_model
    w_perm = jnp.transpose(w.reshape(pred_len, d_model, token_num), (0, 2, 1))
    w_t = jnp.transpose(w_perm.reshape(pred_len, K)).astype(jnp.bfloat16)  # (K, N)
    b_row = b.reshape(1, pred_len).astype(jnp.float32)
    return w_t, b_row


def make_client_head_forward(params, d_model, token_num):
    w_t, b_row = _prepare_head_weights(params, d_model, token_num)
    N = w_t.shape[1]

    @functools.partial(jax.jit, static_argnames=("n_vars",))
    def forward(x_enc, means, stdev, n_vars):
        """x_enc: (B*n_vars, token_num, d_model); means/stdev: (B, 1, n_vars).
        Returns (B, pred_len, n_vars), matching ClientHead.forward."""
        BS, T, D = x_enc.shape
        B = BS // n_vars

        # Free reshape (feature index t*D + d); the weight was permuted to
        # match, so no per-forward transpose / pad / cast of the activation.
        x_flat = x_enc.reshape(BS, T * D)

        # Per-row de-normalization factors: row b*n_vars + v <-> stdev[b, 0, v].
        scale = stdev.reshape(BS, 1).astype(jnp.float32)
        shift = means.reshape(BS, 1).astype(jnp.float32)

        tm = _choose_tm(BS)
        tn = _choose_tn(N)
        y = fused_flatten_head(x_flat, w_t, b_row, scale, shift, tm=tm, tn=tn)

        y = y.reshape(B, n_vars, N)
        # head dropout is eval-mode identity.
        return jnp.transpose(y, (0, 2, 1))                # (B, pred_len, n_vars)

    return forward


# ---------------------------------------------------------------------------
if __name__ == "__main__":
    key = jax.random.PRNGKey(0)
    B, n_vars = 2, 4
    token_num, d_model = 6, 32
    max_backcast_len, max_forecast_len = 48, 80
    pred_len = max_backcast_len + max_forecast_len       # 128

    k_p, k_x, k_m, k_s = jax.random.split(key, 4)
    params = init_client_head_params(k_p, d_model, token_num, pred_len)
    x_enc = jax.random.normal(k_x, (B * n_vars, token_num, d_model), jnp.float32)
    means = jax.random.normal(k_m, (B, 1, n_vars), jnp.float32)
    stdev = jax.random.uniform(k_s, (B, 1, n_vars), jnp.float32,
                               minval=0.5, maxval=1.5)

    forward = make_client_head_forward(params, d_model, token_num)
    x_out = forward(x_enc, means, stdev, n_vars)
    jax.block_until_ready(x_out)

    # Pure-JAX f32 reference reproducing the torch module.
    x_dec = jnp.transpose(
        x_enc.reshape(B, n_vars, token_num, d_model), (0, 1, 3, 2))
    flat = x_dec.reshape(B, n_vars, d_model * token_num)
    ref = flat @ params["weight"].T + params["bias"]     # (B, n_vars, pred_len)
    ref = jnp.transpose(ref, (0, 2, 1)) * stdev + means  # (B, pred_len, n_vars)

    assert x_out.shape == (B, pred_len, n_vars), x_out.shape
    max_err = float(jnp.max(jnp.abs(x_out - ref)))
    assert jnp.allclose(x_out, ref, atol=5e-2, rtol=5e-2), max_err
    print("KERNEL_OK")
</pallas_src>

<mosaic_0001>
module attributes {stable_mosaic.version = 11 : i64} {
  func.func @_head_kernel(%arg0: i32, %arg1: i32, %arg2: memref<8x192xf32, #tpu.memory_space<vmem>>, %arg3: memref<192x128xbf16, #tpu.memory_space<vmem>>, %arg4: memref<1x128xf32, #tpu.memory_space<vmem>>, %arg5: memref<8x1xf32, #tpu.memory_space<vmem>>, %arg6: memref<8x1xf32, #tpu.memory_space<vmem>>, %arg7: memref<8x128xf32, #tpu.memory_space<vmem>>) attributes {dimension_semantics = [#tpu.dimension_semantics<parallel>, #tpu.dimension_semantics<parallel>], iteration_bounds = array<i64: 1, 1>, scalar_prefetch = 0 : i64, scratch_operands = 0 : i64, tpu.core_type = #tpu.core_type<tc>, window_params = [{transform_indices = @transform_0, window_bounds = array<i64: 8, 192>}, {transform_indices = @transform_1, window_bounds = array<i64: 192, 128>}, {transform_indices = @transform_2, window_bounds = array<i64: 1, 128>}, {transform_indices = @transform_3, window_bounds = array<i64: 8, 1>}, {transform_indices = @transform_4, window_bounds = array<i64: 8, 1>}, {transform_indices = @transform_5, window_bounds = array<i64: 8, 128>}]} {
    %c0 = arith.constant 0 : index
    %c0_0 = arith.constant 0 : index
    %0 = vector.load %arg2[%c0, %c0_0] : memref<8x192xf32, #tpu.memory_space<vmem>>, vector<8x192xf32>
    %1 = arith.truncf %0 : vector<8x192xf32> to vector<8x192xbf16>
    %c0_1 = arith.constant 0 : index
    %c0_2 = arith.constant 0 : index
    %2 = vector.load %arg3[%c0_1, %c0_2] : memref<192x128xbf16, #tpu.memory_space<vmem>>, vector<192x128xbf16>
    %cst = arith.constant dense<0.000000e+00> : vector<8x128xf32>
    %3 = tpu.matmul %1, %2, %cst {dimension_numbers = #tpu.dot_dimension_numbers<[1], [0], [0], [1], [0, 0, 1, 1], [], []>} : vector<8x192xbf16>, vector<192x128xbf16>, vector<8x128xf32> -> vector<8x128xf32>
    %c0_3 = arith.constant 0 : index
    %c0_4 = arith.constant 0 : index
    %4 = vector.load %arg4[%c0_3, %c0_4] : memref<1x128xf32, #tpu.memory_space<vmem>>, vector<1x128xf32>
    %5 = vector.broadcast %4 : vector<1x128xf32> to vector<8x128xf32>
    %6 = arith.addf %3, %5 : vector<8x128xf32>
    %c0_5 = arith.constant 0 : index
    %c0_6 = arith.constant 0 : index
    %7 = vector.load %arg5[%c0_5, %c0_6] : memref<8x1xf32, #tpu.memory_space<vmem>>, vector<8x1xf32>
    %8 = vector.broadcast %7 : vector<8x1xf32> to vector<8x128xf32>
    %9 = arith.mulf %6, %8 : vector<8x128xf32>
    %c0_7 = arith.constant 0 : index
    %c0_8 = arith.constant 0 : index
    %10 = vector.load %arg6[%c0_7, %c0_8] : memref<8x1xf32, #tpu.memory_space<vmem>>, vector<8x1xf32>
    %11 = vector.broadcast %10 : vector<8x1xf32> to vector<8x128xf32>
    %12 = arith.addf %9, %11 : vector<8x128xf32>
    %c0_9 = arith.constant 0 : index
    %c0_10 = arith.constant 0 : index
    %13 = vector.load %arg7[%c0_9, %c0_10] : memref<8x128xf32, #tpu.memory_space<vmem>>, vector<8x128xf32>
    tpu.vector_store %arg7[%c0_9, %c0_10], %12 {strides = array<i32>} : memref<8x128xf32, #tpu.memory_space<vmem>>, vector<8x128xf32>,
    return
  }
  func.func @transform_0(%arg0: i32, %arg1: i32) -> (i32, i32) {
    %c0_i32 = arith.constant 0 : i32
    %c0_i32_0 = arith.constant 0 : i32
    return %arg0, %c0_i32 : i32, i32
  }
  func.func @transform_1(%arg0: i32, %arg1: i32) -> (i32, i32) {
    %c0_i32 = arith.constant 0 : i32
    %c0_i32_0 = arith.constant 0 : i32
    return %c0_i32, %arg1 : i32, i32
  }
  func.func @transform_2(%arg0: i32, %arg1: i32) -> (i32, i32) {
    %c0_i32 = arith.constant 0 : i32
    %c0_i32_0 = arith.constant 0 : i32
    return %c0_i32, %arg1 : i32, i32
  }
  func.func @transform_3(%arg0: i32, %arg1: i32) -> (i32, i32) {
    %c0_i32 = arith.constant 0 : i32
    %c0_i32_0 = arith.constant 0 : i32
    return %arg0, %c0_i32 : i32, i32
  }
  func.func @transform_4(%arg0: i32, %arg1: i32) -> (i32, i32) {
    %c0_i32 = arith.constant 0 : i32
    %c0_i32_0 = arith.constant 0 : i32
    return %arg0, %c0_i32 : i32, i32
  }
  func.func @transform_5(%arg0: i32, %arg1: i32) -> (i32, i32) {
    %c0_i32 = arith.constant 0 : i32
    return %arg0, %arg1 : i32, i32
  }
}

</mosaic_0001>

<llo_original>
// kernel: forward.1
$region0: #{forward.1}
  #allocation0 [shape = 'u32[]', space=smem, size = 0x4, offset = 0x4, fixed_abs, tag = 'smem constant byte address 0x4 - core index']
  #allocation1 [shape = 'u32[144,128]{1,0:T(1,128)}', space=vmem, size = 0x12000, scoped, tag = 'internal scratch']
  %s0 = inlined_call_operand.vmem [shape: f32[8,192], index: 0, kind: input, shape index: {}]
  %s1 = inlined_call_operand.vmem [shape: bf16[192,128], index: 1, kind: input, shape index: {}]
  %s2 = inlined_call_operand.vmem [shape: f32[1,128], index: 2, kind: input, shape index: {}]
  %s3 = inlined_call_operand.vmem [shape: f32[8,1], index: 3, kind: input, shape index: {}]
  %s4 = inlined_call_operand.vmem [shape: f32[8,1], index: 4, kind: input, shape index: {}]
  %s5 = inlined_call_operand.hbm [shape: f32[8,128], index: 5, kind: output, shape index: {}]
  %s6 = sld [smem:[#allocation0]]
  $region30: #{forward.1} parent=0
    _
  %s8 = ssub.s32 1, %s6
  %s9 = scalar_select 0, %s8, %s6
  $region1: #{forward.1} parent=0
    #allocation2 [shape = 'u8[4096]{0}', space=vmem, size = 0x1000, scoped, tag = 'output window, operand 0, single buffered']
    #allocation3 [shape = 's32[1]{0}', space=sflag, size = 0x4, scoped, tag = 'scoped memory for forward.1']
    %10 = vsyncpa [#allocation3], 0
    // Predicated region
    $region2: #{forward.1} parent=1 // pred_check
      _
    $region3: #{forward.1} parent=1 // pred_check_branch
      %12 = sbr.rel (0) target = $region5
    $region4: #{forward.1} parent=1 // pred_region
      _
    $region5: #{forward.1} parent=1 // pred_fallthru
      _
    // Predicated region
    $region6: #{forward.1} parent=1 // pred_check
      _
    $region7: #{forward.1} parent=1 // pred_check_branch
      %14 = sbr.rel (0) target = $region9
    $region8: #{forward.1} parent=1 // pred_region
      _
    $region9: #{forward.1} parent=1 // pred_fallthru
      _
    // Predicated region
    $region10: #{forward.1} parent=1 // pred_check
      _
    $region11: #{forward.1} parent=1 // pred_check_branch
      %16 = sbr.rel (0) target = $region13
    $region12: #{forward.1} parent=1 // pred_region
      _
    $region13: #{forward.1} parent=1 // pred_fallthru
      _
    // Predicated region
    $region14: #{forward.1} parent=1 // pred_check
      _
    $region15: #{forward.1} parent=1 // pred_check_branch
      %18 = sbr.rel (0) target = $region17
    $region16: #{forward.1} parent=1 // pred_region
      _
    $region17: #{forward.1} parent=1 // pred_fallthru
      _
    // Predicated region
    $region18: #{forward.1} parent=1 // pred_check
      _
    $region19: #{forward.1} parent=1 // pred_check_branch
      %20 = sbr.rel (0) target = $region21
    $region20: #{forward.1} parent=1 // pred_region
      _
    $region21: #{forward.1} parent=1 // pred_fallthru
      _
    %v22 = vld [vmem:[%s0] sm:$0xff]
    %v23 = vld [vmem:[%s0 + $0x8] sm:$0xff]
    %v24 = vpack.c.bf16 %v22, %v22
    %v25 = vpack.c.bf16 %v23, %v23
    %v26 = vld [vmem:[%s1] sm:$0xf]
    %v27 = vld [vmem:[%s1 + $0x4] sm:$0xf]
    %v28 = vld [vmem:[%s1 + $0x8] sm:$0xf]
    %v29 = vld [vmem:[%s1 + $0xc] sm:$0xf]
    %v30 = vld [vmem:[%s1 + $0x10] sm:$0xf]
    %v31 = vld [vmem:[%s1 + $0x14] sm:$0xf]
    %v32 = vld [vmem:[%s1 + $0x18] sm:$0xf]
    %v33 = vld [vmem:[%s1 + $0x1c] sm:$0xf]
    %v34 = vld [vmem:[%s1 + $0x20] sm:$0xf]
    %v35 = vld [vmem:[%s1 + $0x24] sm:$0xf]
    %v36 = vld [vmem:[%s1 + $0x28] sm:$0xf]
    %v37 = vld [vmem:[%s1 + $0x2c] sm:$0xf]
    %v38 = vld [vmem:[%s1 + $0x30] sm:$0xf]
    %v39 = vld [vmem:[%s1 + $0x34] sm:$0xf]
    %v40 = vld [vmem:[%s1 + $0x38] sm:$0xf]
    %v41 = vld [vmem:[%s1 + $0x3c] sm:$0xf]
    %v42 = vld [vmem:[%s1 + $0x40] sm:$0xf]
    %v43 = vld [vmem:[%s1 + $0x44] sm:$0xf]
    %v44 = vld [vmem:[%s1 + $0x48] sm:$0xf]
    %v45 = vld [vmem:[%s1 + $0x4c] sm:$0xf]
    %v46 = vld [vmem:[%s1 + $0x50] sm:$0xf]
    %v47 = vld [vmem:[%s1 + $0x54] sm:$0xf]
    %v48 = vld [vmem:[%s1 + $0x58] sm:$0xf]
    %v49 = vld [vmem:[%s1 + $0x5c] sm:$0xf]
    %v50 = vld [vmem:[%s2] sm:$0x1]
    %v52 = vlaneseq
    %v53 = vshrl.u32 %v52, 7
    %v54 = vsub.s32 0, %v53
    %v55 = vrot.slane %v50, %v54
    %v81 = vunpack.c.l.b16 %v26
    %v82 = vunpack.c.l.b16 %v27
    %v83 = vunpack.c.l.b16 %v28
    %v84 = vunpack.c.l.b16 %v29
    %v85 = vunpack.c.l.b16 %v30
    %v86 = vunpack.c.l.b16 %v31
    %v87 = vunpack.c.l.b16 %v32
    %v88 = vunpack.c.l.b16 %v33
    %v89 = vunpack.c.l.b16 %v34
    %v90 = vunpack.c.l.b16 %v35
    %v91 = vunpack.c.l.b16 %v36
    %v92 = vunpack.c.l.b16 %v37
    %v93 = vunpack.c.l.b16 %v38
    %v94 = vunpack.c.l.b16 %v39
    %v95 = vunpack.c.l.b16 %v40
    %v96 = vunpack.c.l.b16 %v41
    %v97 = vunpack.c.l.b16 %v42
    %v98 = vunpack.c.l.b16 %v43
    %v99 = vunpack.c.l.b16 %v44
    %v100 = vunpack.c.l.b16 %v45
    %v101 = vunpack.c.l.b16 %v46
    %v102 = vunpack.c.l.b16 %v47
    %v103 = vunpack.c.l.b16 %v48
    %v104 = vunpack.c.l.b16 %v49
    %v105 = vpack.c.b16 %v82, %v81
    %v106 = vpack.c.b16 %v84, %v83
    %v107 = vpack.c.b16 %v86, %v85
    %v108 = vpack.c.b16 %v88, %v87
    %v109 = vpack.c.b16 %v90, %v89
    %v110 = vpack.c.b16 %v92, %v91
    %v111 = vpack.c.b16 %v94, %v93
    %v112 = vpack.c.b16 %v96, %v95
    %v113 = vpack.c.b16 %v98, %v97
    %v114 = vpack.c.b16 %v100, %v99
    %v115 = vpack.c.b16 %v102, %v101
    %v116 = vpack.c.b16 %v104, %v103
    %vm129 = vcmask 523264
    %v131 = vsel %vm129, %v25, 0
    %133 = vmatprep.subr.bf16.mxu0 0
    %134 = vmatpush1.bf16.msra.mxu0 %v105
    %135 = vmatprep.subr.bf16.mxu0 0
    %136 = vmatpush1.bf16.msra.mxu0 %v106
    %137 = vmatprep.subr.bf16.mxu0 0
    %138 = vmatpush1.bf16.msra.mxu0 %v107
    %139 = vmatprep.subr.bf16.mxu0 0
    %140 = vmatpush1.bf16.msra.mxu0 %v108
    %141 = vmatprep.subr.bf16.mxu0 0
    %142 = vmatpush1.bf16.msra.mxu0 %v109
    %143 = vmatprep.subr.bf16.mxu0 0
    %144 = vmatpush1.bf16.msra.mxu0 %v110
    %145 = vmatprep.subr.bf16.mxu0 0
    %146 = vmatpush1.bf16.msra.mxu0 %v111
    %147 = vmatprep.subr.bf16.mxu0 0
    %148 = vmatpush1.bf16.msra.mxu0 %v112
    %149 = vmatprep.subr.bf16.mxu0 0
    %150 = vmatpush1.bf16.msra.mxu0 %v113
    %151 = vmatprep.subr.bf16.mxu0 0
    %152 = vmatpush1.bf16.msra.mxu0 %v114
    %153 = vmatprep.subr.bf16.mxu0 0
    %154 = vmatpush1.bf16.msra.mxu0 %v115
    %155 = vmatprep.subr.bf16.mxu0 0
    %156 = vmatpush1.bf16.msra.mxu0 %v116
    %157 = vmatprep.subr.bf16.mxu0 0
    %158 = vmatpush1.bf16.msra.mxu0 0
    %159 = vmatprep.subr.bf16.mxu0 0
    %160 = vmatpush1.bf16.msra.mxu0 0
    %161 = vmatprep.subr.bf16.mxu0 0
    %162 = vmatpush1.bf16.msra.mxu0 0
    %163 = vmatprep.subr.bf16.mxu0 0
    %164 = vmatpush1.bf16.msra.mxu0 0
    %165 = vmatprep.mubr.bf16.mxu0 %v131
    %166 = vmatmul.mubr.bf16.gmra.mrb[0].mxu0 %v24
    %v167 = vpop.f32.mrb[0].mxu0
    %v168 = vadd.f32 %v55, %v167
    %v169 = vpop.f32.mrb[0].mxu0
    %v170 = vpop.f32.mrb[0].mxu0
    %v171 = vpop.f32.mrb[0].mxu0
    %172 = vdwg.mxu0
    %v173 = vld [vmem:[%s3] sm:$0xff]
    %175 = vset.pattern.permute.xlu0 0
    %176 = vperm.xlu0 %175, %v173
    %v177 = vpop.permute.xlu0 %176
    %v179 = vmul.f32 %v168, %v177
    %v180 = vld [vmem:[%s4] sm:$0xff]
    %182 = vset.pattern.permute.xlu0 0
    %183 = vperm.xlu0 %182, %v180
    %v184 = vpop.permute.xlu0 %183
    %v186 = vadd.f32 %v179, %v184
    %187 = vst [vmem:[#allocation2] sm:$0xff] %v186
    // Predicated region
    $region22: #{forward.1} parent=1 // pred_check
      _
    $region23: #{forward.1} parent=1 // pred_check_branch
      %189 = sbr.rel (0) target = $region25
    $region24: #{forward.1} parent=1 // pred_region
      %s191 = ssub.s32 128, 128
      %192 = vsyncadd [#allocation3], %s191
      %s194 = sshll.u32 [#allocation2], 4
      %s195 = int_to_ptr.vmem [resolvable:$true] %s194
      %197 = dma.vmem_to_hbm [thread:$0]  %s195, 128, %s5, [#allocation3]
    $region25: #{forward.1} parent=1 // pred_fallthru
      _
    // Predicated region
    $region26: #{forward.1} parent=1 // pred_check
      _
    $region27: #{forward.1} parent=1 // pred_check_branch
      %199 = sbr.rel (0) target = $region29
    $region28: #{forward.1} parent=1 // pred_region
      %200 = dma.done [#allocation3], 128
    $region29: #{forward.1} parent=1 // pred_fallthru
      _
    %201 = vsyncpa [#allocation3], 1

</llo_original>
